<compile_context>
chip_gen: v6e
topology: v6e:2x2x1
jax: 0.10.0
libtpu: 0.0.40
codegen_flags: <defaults>
</compile_context>

<pallas_src>
import jax
import jax.numpy as jnp
from jax import lax
from jax.experimental import pallas as pl
from jax.experimental.pallas import tpu as pltpu

EPS = 1e-5


def _batchnorm_kernel(x_ref, gamma_ref, beta_ref, o_ref):
    # One (N, TILE_C) channel strip resident in VMEM; reduction over batch (sublanes).
    x = x_ref[...]
    xf = x.astype(jnp.float32)
    n = xf.shape[0]
    inv_n = 1.0 / n

    mean = jnp.sum(xf, axis=0, keepdims=True) * inv_n               # (1, TILE_C)
    centered = xf - mean                                            # stats only
    var = jnp.sum(centered * centered, axis=0, keepdims=True) * inv_n  # biased var
    inv_std = lax.rsqrt(var + EPS)                                  # (1, TILE_C)

    gamma = gamma_ref[...].astype(jnp.float32)                      # (1, TILE_C)
    beta = beta_ref[...].astype(jnp.float32)                        # (1, TILE_C)

    # Fold the affine into a single fused multiply-add per element.
    scale = gamma * inv_std                                         # (1, TILE_C)
    shift = beta - mean * scale                                     # (1, TILE_C)

    o_ref[...] = (xf * scale + shift).astype(o_ref.dtype)


def _round_up(v, m):
    return (v + m - 1) // m * m


def batchnorm1d(x, gamma, beta, *, tile_c=512, vmem_budget_bytes=12 * 1024 * 1024):
    """Training-mode BatchNorm1d forward. x: (N, C); gamma, beta: (C,)."""
    n, c = x.shape
    itemsize = jnp.dtype(x.dtype).itemsize

    # Shrink the channel strip until 2 double-buffered in + 2 out blocks fit the budget
    # (conservative so the same tiling works on v7x's 64 MiB VMEM).
    tc = max(128, _round_up(tile_c, 128))
    while tc > 128 and 4 * n * tc * itemsize > vmem_budget_bytes:
        tc //= 2
    tc = max(tc, 128)

    # Pad C so every block is a lane-dense multiple of 128 (unmasked full-lane stores).
    if c <= tc:
        c_pad = _round_up(c, 128)
        tc = c_pad
    else:
        c_pad = _round_up(c, tc)

    if c_pad != c:
        x_in = jnp.pad(x, ((0, 0), (0, c_pad - c)))
        gamma_in = jnp.pad(gamma, (0, c_pad - c))
        beta_in = jnp.pad(beta, (0, c_pad - c))
    else:
        x_in, gamma_in, beta_in = x, gamma, beta

    gamma2d = gamma_in.reshape(1, c_pad)
    beta2d = beta_in.reshape(1, c_pad)
    num_tiles = c_pad // tc

    out = pl.pallas_call(
        _batchnorm_kernel,
        out_shape=jax.ShapeDtypeStruct((n, c_pad), x.dtype),
        grid_spec=pl.GridSpec(
            grid=(num_tiles,),
            in_specs=[
                pl.BlockSpec((n, tc), lambda j: (0, j)),
                pl.BlockSpec((1, tc), lambda j: (0, j)),
                pl.BlockSpec((1, tc), lambda j: (0, j)),
            ],
            out_specs=pl.BlockSpec((n, tc), lambda j: (0, j)),
        ),
        compiler_params=pltpu.CompilerParams(
            # Channels are independent -> shard grid across TensorCores on v7x.
            dimension_semantics=("parallel",),
            # Headroom for f32 temporaries on top of the pipelined block buffers;
            # stays well under v7x's 64 MiB physical VMEM per core.
            vmem_limit_bytes=48 * 1024 * 1024,
        ),
    )(x_in, gamma2d, beta2d)

    if c_pad != c:
        out = out[:, :c]
    return out


def batchnorm1d_ref(x, gamma, beta):
    """Pure-JAX reference (training-mode BatchNorm1d, biased variance)."""
    xf = x.astype(jnp.float32)
    mean = jnp.mean(xf, axis=0, keepdims=True)
    var = jnp.mean((xf - mean) ** 2, axis=0, keepdims=True)
    y = (xf - mean) / jnp.sqrt(var + EPS) * gamma.reshape(1, -1) + beta.reshape(1, -1)
    return y.astype(x.dtype)


if __name__ == "__main__":
    key = jax.random.PRNGKey(0)
    k_x, k_g, k_b = jax.random.split(key, 3)

    N, C = 8, 32  # batch=8, input_dim=32 (small demo shape)
    x = jax.random.normal(k_x, (N, C), dtype=jnp.float32)

    # PyTorch default init is gamma=1, beta=0; perturb slightly so the affine
    # path is actually exercised.
    gamma = 1.0 + 0.1 * jax.random.normal(k_g, (C,), dtype=jnp.float32)
    beta = 0.1 * jax.random.normal(k_b, (C,), dtype=jnp.float32)

    y = batchnorm1d(x, gamma, beta)
    jax.block_until_ready(y)

    y_ref = batchnorm1d_ref(x, gamma, beta)
    assert y.shape == y_ref.shape, "shape mismatch vs reference"
    assert jnp.allclose(y, y_ref, atol=1e-5, rtol=1e-5), "mismatch vs reference"

    # TODO(synk): running_mean/running_var tracking (inference mode) not implemented;
    # kernel reproduces the training-mode forward only.
    print("KERNEL_OK")
</pallas_src>

<mosaic_0001>
module attributes {stable_mosaic.version = 11 : i64} {
  func.func @_batchnorm_kernel(%arg0: i32, %arg1: memref<8x128xf32, #tpu.memory_space<vmem>>, %arg2: memref<1x128xf32, #tpu.memory_space<vmem>>, %arg3: memref<1x128xf32, #tpu.memory_space<vmem>>, %arg4: memref<8x128xf32, #tpu.memory_space<vmem>>) attributes {dimension_semantics = [#tpu.dimension_semantics<parallel>], iteration_bounds = array<i64: 1>, scalar_prefetch = 0 : i64, scratch_operands = 0 : i64, tpu.core_type = #tpu.core_type<tc>, window_params = [{transform_indices = @transform_0, window_bounds = array<i64: 8, 128>}, {transform_indices = @transform_1, window_bounds = array<i64: 1, 128>}, {transform_indices = @transform_2, window_bounds = array<i64: 1, 128>}, {transform_indices = @transform_3, window_bounds = array<i64: 8, 128>}]} {
    %c0 = arith.constant 0 : index
    %c0_0 = arith.constant 0 : index
    %0 = vector.load %arg1[%c0, %c0_0] : memref<8x128xf32, #tpu.memory_space<vmem>>, vector<8x128xf32>
    %cst = arith.constant dense<0.000000e+00> : vector<128xf32>
    %1 = vector.multi_reduction <add>, %0, %cst [0] : vector<8x128xf32> to vector<128xf32>
    %2 = vector.shape_cast %1 : vector<128xf32> to vector<1x128xf32>
    %cst_1 = arith.constant 1.250000e-01 : f32
    %3 = vector.broadcast %cst_1 : f32 to vector<1x128xf32>
    %4 = arith.mulf %2, %3 : vector<1x128xf32>
    %5 = vector.broadcast %4 : vector<1x128xf32> to vector<8x128xf32>
    %6 = arith.subf %0, %5 : vector<8x128xf32>
    %7 = arith.mulf %6, %6 : vector<8x128xf32>
    %cst_2 = arith.constant dense<0.000000e+00> : vector<128xf32>
    %8 = vector.multi_reduction <add>, %7, %cst_2 [0] : vector<8x128xf32> to vector<128xf32>
    %9 = vector.shape_cast %8 : vector<128xf32> to vector<1x128xf32>
    %cst_3 = arith.constant 1.250000e-01 : f32
    %10 = vector.broadcast %cst_3 : f32 to vector<1x128xf32>
    %11 = arith.mulf %9, %10 : vector<1x128xf32>
    %cst_4 = arith.constant 9.99999974E-6 : f32
    %12 = vector.broadcast %cst_4 : f32 to vector<1x128xf32>
    %13 = arith.addf %11, %12 : vector<1x128xf32>
    %14 = math.rsqrt %13 : vector<1x128xf32>
    %c0_5 = arith.constant 0 : index
    %c0_6 = arith.constant 0 : index
    %15 = vector.load %arg2[%c0_5, %c0_6] : memref<1x128xf32, #tpu.memory_space<vmem>>, vector<1x128xf32>
    %c0_7 = arith.constant 0 : index
    %c0_8 = arith.constant 0 : index
    %16 = vector.load %arg3[%c0_7, %c0_8] : memref<1x128xf32, #tpu.memory_space<vmem>>, vector<1x128xf32>
    %17 = arith.mulf %15, %14 : vector<1x128xf32>
    %18 = arith.mulf %4, %17 : vector<1x128xf32>
    %19 = arith.subf %16, %18 : vector<1x128xf32>
    %20 = vector.broadcast %17 : vector<1x128xf32> to vector<8x128xf32>
    %21 = arith.mulf %0, %20 : vector<8x128xf32>
    %22 = vector.broadcast %19 : vector<1x128xf32> to vector<8x128xf32>
    %23 = arith.addf %21, %22 : vector<8x128xf32>
    %c0_9 = arith.constant 0 : index
    %c0_10 = arith.constant 0 : index
    %24 = vector.load %arg4[%c0_9, %c0_10] : memref<8x128xf32, #tpu.memory_space<vmem>>, vector<8x128xf32>
    tpu.vector_store %arg4[%c0_9, %c0_10], %23 {strides = array<i32>} : memref<8x128xf32, #tpu.memory_space<vmem>>, vector<8x128xf32>,
    return
  }
  func.func @transform_0(%arg0: i32) -> (i32, i32) {
    %c0_i32 = arith.constant 0 : i32
    %c0_i32_0 = arith.constant 0 : i32
    return %c0_i32, %arg0 : i32, i32
  }
  func.func @transform_1(%arg0: i32) -> (i32, i32) {
    %c0_i32 = arith.constant 0 : i32
    %c0_i32_0 = arith.constant 0 : i32
    return %c0_i32, %arg0 : i32, i32
  }
  func.func @transform_2(%arg0: i32) -> (i32, i32) {
    %c0_i32 = arith.constant 0 : i32
    %c0_i32_0 = arith.constant 0 : i32
    return %c0_i32, %arg0 : i32, i32
  }
  func.func @transform_3(%arg0: i32) -> (i32, i32) {
    %c0_i32 = arith.constant 0 : i32
    %c0_i32_0 = arith.constant 0 : i32
    return %c0_i32, %arg0 : i32, i32
  }
}

</mosaic_0001>

<llo_original>
// kernel: tpu_custom_call.1
$region0: #{tpu_custom_call.1}
  #allocation0 [shape = 'u32[]', space=smem, size = 0x4, offset = 0x4, fixed_abs, tag = 'smem constant byte address 0x4 - core index']
  #allocation1 [shape = 'u32[144,128]{1,0:T(1,128)}', space=vmem, size = 0x12000, scoped, tag = 'internal scratch']
  %s0 = inlined_call_operand.hbm [shape: f32[8,128], index: 0, kind: input, shape index: {}]
  %s1 = inlined_call_operand.vmem [shape: f32[1,128], index: 1, kind: input, shape index: {}]
  %s2 = inlined_call_operand.vmem [shape: f32[1,128], index: 2, kind: input, shape index: {}]
  %s3 = inlined_call_operand.hbm [shape: f32[8,128], index: 3, kind: output, shape index: {}]
  %s4 = sld [smem:[#allocation0]]
  $region26: #{tpu_custom_call.1} parent=0
    _
  %s6 = ssub.s32 1, %s4
  %s7 = scalar_select 0, %s6, %s4
  $region1: #{tpu_custom_call.1} parent=0
    #allocation2 [shape = 'u8[4096]{0}', space=vmem, size = 0x1000, scoped, tag = 'input window, operand 0, single buffered']
    #allocation3 [shape = 's32[1]{0}', space=sflag, size = 0x4, scoped, tag = 'scoped memory for tpu_custom_call.1']
    #allocation4 [shape = 's32[1]{0}', space=sflag, size = 0x4, scoped, tag = 'scoped memory for tpu_custom_call.1']
    #allocation5 [shape = 'u8[4096]{0}', space=vmem, size = 0x1000, scoped, tag = 'output window, operand 0, single buffered']
    %8 = vsyncpa [#allocation3], 0
    %9 = vsyncpa [#allocation4], 0
    // Predicated region
    $region2: #{tpu_custom_call.1} parent=1 // pred_check
      _
    $region3: #{tpu_custom_call.1} parent=1 // pred_check_branch
      %11 = sbr.rel (0) target = $region5
    $region4: #{tpu_custom_call.1} parent=1 // pred_region
      %s13 = ssub.s32 128, 128
      %14 = vsyncadd [#allocation3], %s13
      %s16 = sshll.u32 [#allocation2], 4
      %s17 = int_to_ptr.vmem [resolvable:$true] %s16
      %19 = dma.hbm_to_vmem [thread:$0]  %s0, 128, %s17, [#allocation3]
    $region5: #{tpu_custom_call.1} parent=1 // pred_fallthru
      _
    // Predicated region
    $region6: #{tpu_custom_call.1} parent=1 // pred_check
      _
    $region7: #{tpu_custom_call.1} parent=1 // pred_check_branch
      %21 = sbr.rel (0) target = $region9
    $region8: #{tpu_custom_call.1} parent=1 // pred_region
      _
    $region9: #{tpu_custom_call.1} parent=1 // pred_fallthru
      _
    // Predicated region
    $region10: #{tpu_custom_call.1} parent=1 // pred_check
      _
    $region11: #{tpu_custom_call.1} parent=1 // pred_check_branch
      %23 = sbr.rel (0) target = $region13
    $region12: #{tpu_custom_call.1} parent=1 // pred_region
      _
    $region13: #{tpu_custom_call.1} parent=1 // pred_fallthru
      _
    // Predicated region
    $region14: #{tpu_custom_call.1} parent=1 // pred_check
      _
    $region15: #{tpu_custom_call.1} parent=1 // pred_check_branch
      %25 = sbr.rel (0) target = $region17
    $region16: #{tpu_custom_call.1} parent=1 // pred_region
      %26 = dma.done [#allocation3], 128
    $region17: #{tpu_custom_call.1} parent=1 // pred_fallthru
      _
    %v27 = vld [vmem:[#allocation2] sm:$0xff]
    %v28 = vrot.slane %v27, 4
    %v29 = vadd.f32 %v27, %v28
    %v30 = vrot.slane %v29, 2
    %v31 = vadd.f32 %v29, %v30
    %v32 = vrot.slane %v31, 1
    %v33 = vadd.f32 %v31, %v32
    %v34 = vmul.f32 %v33, 0.125
    %v35 = vsub.f32 %v27, %v34
    %v36 = vmul.f32 %v35, %v35
    %v37 = vrot.slane %v36, 4
    %v38 = vadd.f32 %v36, %v37
    %v39 = vrot.slane %v38, 2
    %v40 = vadd.f32 %v38, %v39
    %v41 = vrot.slane %v40, 1
    %v42 = vadd.f32 %v40, %v41
    %v43 = vmul.f32 %v42, 0.125
    %v44 = vadd.f32 %v43, 1e-05
    %v45 = vrsqrt.pop %v44
    %v46 = vld [vmem:[%s1] sm:$0x1]
    %v47 = vld [vmem:[%s2] sm:$0x1]
    %v48 = vmul.f32 %v46, %v45
    %v49 = vmul.f32 %v34, %v48
    %v50 = vsub.f32 %v47, %v49
    %v52 = vlaneseq
    %v53 = vshrl.u32 %v52, 7
    %v54 = vsub.s32 0, %v53
    %v55 = vrot.slane %v48, %v54
    %v57 = vmul.f32 %v27, %v55
    %v59 = vlaneseq
    %v60 = vshrl.u32 %v59, 7
    %v61 = vsub.s32 0, %v60
    %v62 = vrot.slane %v50, %v61
    %v64 = vadd.f32 %v57, %v62
    %65 = vst [vmem:[#allocation5] sm:$0xff] %v64
    // Predicated region
    $region18: #{tpu_custom_call.1} parent=1 // pred_check
      _
    $region19: #{tpu_custom_call.1} parent=1 // pred_check_branch
      %67 = sbr.rel (0) target = $region21
    $region20: #{tpu_custom_call.1} parent=1 // pred_region
      %s69 = ssub.s32 128, 128
      %70 = vsyncadd [#allocation4], %s69
      %s72 = sshll.u32 [#allocation5], 4
      %s73 = int_to_ptr.vmem [resolvable:$true] %s72
      %75 = dma.vmem_to_hbm [thread:$0]  %s73, 128, %s3, [#allocation4]
    $region21: #{tpu_custom_call.1} parent=1 // pred_fallthru
      _
    // Predicated region
    $region22: #{tpu_custom_call.1} parent=1 // pred_check
      _
    $region23: #{tpu_custom_call.1} parent=1 // pred_check_branch
      %77 = sbr.rel (0) target = $region25
    $region24: #{tpu_custom_call.1} parent=1 // pred_region
      %78 = dma.done [#allocation4], 128
    $region25: #{tpu_custom_call.1} parent=1 // pred_fallthru
      _
    %79 = vsyncpa [#allocation3], 1
    %80 = vsyncpa [#allocation4], 1

</llo_original>
